<compile_context>
chip_gen: v5e
topology: v5e:2x2
jax: 0.10.0
libtpu: 0.0.40
codegen_flags: <defaults>
</compile_context>

<pallas_src>
import jax
import jax.numpy as jnp
from jax.experimental import pallas as pl
from jax.experimental.pallas import tpu as pltpu


def _sig(x):
    # sigmoid(x) == 0.5 * (tanh(0.5 * x) + 1); single EUP op (tanh) instead of exp+recip.
    return 0.5 * (jnp.tanh(0.5 * x) + 1.0)


def lstm_critic_kernel(x_ref, h0_ref, c0_ref, wih_ref, whh_ref, b_ref,
                       wfc_ref, bfc_ref, val_ref, h_ref, c_ref):
    """One LSTM step per grid iteration t; h_ref/c_ref are VMEM-resident carries."""
    t = pl.program_id(0)
    H = h_ref.shape[-1]

    @pl.when(t == 0)
    def _():
        h_ref[...] = h0_ref[...]
        c_ref[...] = c0_ref[...]

    # Two MXU pushes share the f32 accumulation of the 4H gate columns:
    #   (B, D) bf16 @ (D, 4H) bf16  +  (B, H) bf16 @ (H, 4H) bf16  -> (B, 4H) f32
    x = x_ref[0].astype(jnp.bfloat16)          # (B, D)
    h = h_ref[...].astype(jnp.bfloat16)        # (B, H)  carried state stays f32
    gates = (jnp.dot(x, wih_ref[...], preferred_element_type=jnp.float32)
             + jnp.dot(h, whh_ref[...], preferred_element_type=jnp.float32)
             + b_ref[...])

    # PyTorch gate ordering: input, forget, cell(g), output. H is a multiple of 128,
    # so these lane slices are free views (no relayout).
    i_g = _sig(gates[:, 0 * H:1 * H])
    f_g = _sig(gates[:, 1 * H:2 * H])
    g_g = jnp.tanh(gates[:, 2 * H:3 * H])
    o_g = _sig(gates[:, 3 * H:4 * H])

    c_new = f_g * c_ref[...] + i_g * g_g
    h_new = o_g * jnp.tanh(c_new)
    c_ref[...] = c_new                          # carried to step t+1, written to HBM once
    h_ref[...] = h_new

    # Linear head as VPU multiply + XLU lane reduction (avoids an N=1 MXU pass);
    # b_fc comes from SMEM as a true scalar.
    val_ref[0] = (jnp.sum(h_new * wfc_ref[...], axis=-1, keepdims=True)
                  + bfc_ref[0])


def prepare_params(params):
    """One-time layout work: transpose, fold biases, cast weights to bf16.

    Call once; reuse for every forward/rollout (no per-step host-side weight work)."""
    D = params["w_ih"].shape[1]
    H = params["w_hh"].shape[1]
    assert H % 128 == 0, "hidden_size must be a multiple of 128 (lane-aligned gate slices)"
    return {
        "w_ih_t": params["w_ih"].T.astype(jnp.bfloat16),                   # (D, 4H) bf16
        "w_hh_t": params["w_hh"].T.astype(jnp.bfloat16),                   # (H, 4H) bf16
        "b_gates": (params["b_ih"] + params["b_hh"]).reshape(1, 4 * H)
                   .astype(jnp.float32),                                   # (1, 4H) f32
        "w_fc": params["w_fc"].reshape(1, H).astype(jnp.float32),          # (1, H)  f32
        "b_fc": params["b_fc"].reshape(1).astype(jnp.float32),             # (1,)    f32 (SMEM)
        "state_dim": D,
        "hidden_size": H,
    }


def _rollout_pallas_call(states_tbd, h0, c0, prepared):
    """states_tbd: (T, B, D) f32. Returns values (T, B), h_final (B, H), c_final (B, H)."""
    T, B, D = states_tbd.shape
    H = prepared["hidden_size"]

    const = lambda shape: pl.BlockSpec(shape, lambda t, s=shape: (0,) * len(s))

    values, h_new, c_new = pl.pallas_call(
        lstm_critic_kernel,
        out_shape=(
            jax.ShapeDtypeStruct((T, B, 1), jnp.float32),
            jax.ShapeDtypeStruct((B, H), jnp.float32),
            jax.ShapeDtypeStruct((B, H), jnp.float32),
        ),
        grid=(T,),
        in_specs=[
            pl.BlockSpec((1, B, D), lambda t: (t, 0, 0)),       # x_t streamed per step
            const((B, H)),                                      # h0 (read at t == 0)
            const((B, H)),                                      # c0 (read at t == 0)
            const((D, 4 * H)),                                  # W_ih^T : one DMA total
            const((H, 4 * H)),                                  # W_hh^T : one DMA total
            const((1, 4 * H)),                                  # b_ih + b_hh
            const((1, H)),                                      # w_fc
            pl.BlockSpec(memory_space=pltpu.MemorySpace.SMEM),  # b_fc scalar
        ],
        out_specs=(
            pl.BlockSpec((1, B, 1), lambda t: (t, 0, 0)),       # per-step value
            const((B, H)),                                      # h carry -> final h
            const((B, H)),                                      # c carry -> final c
        ),
        # h0 -> h_final, c0 -> c_final: donating callers avoid fresh HBM allocs per step.
        input_output_aliases={1: 1, 2: 2},
        compiler_params=pltpu.CompilerParams(
            dimension_semantics=("arbitrary",)),                # sequential recurrence
    )(states_tbd, h0, c0, prepared["w_ih_t"], prepared["w_hh_t"],
      prepared["b_gates"], prepared["w_fc"], prepared["b_fc"])

    return values[..., 0], h_new, c_new


def _init_hidden(hidden, B, H):
    if hidden is None:
        return jnp.zeros((B, H), jnp.float32), jnp.zeros((B, H), jnp.float32)
    return (hidden[0].reshape(B, H).astype(jnp.float32),
            hidden[1].reshape(B, H).astype(jnp.float32))


def lstm_critic_forward(state, prepared, hidden=None):
    """Module-equivalent single step. state: (B, D) f32.
    Returns (value (B,), (h_new (1,B,H), c_new (1,B,H)))."""
    B, _ = state.shape
    H = prepared["hidden_size"]
    h0, c0 = _init_hidden(hidden, B, H)
    values, h_new, c_new = _rollout_pallas_call(state[None], h0, c0, prepared)
    return values[0], (h_new[None], c_new[None])


def lstm_critic_rollout(states_tbd, prepared, hidden=None):
    """Apply the module forward T times, feeding the hidden state back each step,
    with weights loaded once and h/c kept VMEM-resident across steps.
    states_tbd: (T, B, D). Returns (values (T, B), (h (1,B,H), c (1,B,H)))."""
    T, B, _ = states_tbd.shape
    H = prepared["hidden_size"]
    h0, c0 = _init_hidden(hidden, B, H)
    values, h_new, c_new = _rollout_pallas_call(states_tbd, h0, c0, prepared)
    return values, (h_new[None], c_new[None])


def init_params(key, state_dim, hidden_size):
    """Deterministic init mimicking PyTorch's U(-1/sqrt(H), 1/sqrt(H))."""
    k = 1.0 / jnp.sqrt(jnp.float32(hidden_size))
    keys = jax.random.split(key, 6)
    u = lambda kk, shape: jax.random.uniform(kk, shape, jnp.float32, -k, k)
    return {
        "w_ih": u(keys[0], (4 * hidden_size, state_dim)),
        "w_hh": u(keys[1], (4 * hidden_size, hidden_size)),
        "b_ih": u(keys[2], (4 * hidden_size,)),
        "b_hh": u(keys[3], (4 * hidden_size,)),
        "w_fc": u(keys[4], (1, hidden_size)),
        "b_fc": u(keys[5], (1,)),
    }


def reference_step(x, h0, c0, prepared):
    """Plain-JAX single step using the same prepared (bf16) weights."""
    H = prepared["hidden_size"]
    gates = (jnp.dot(x.astype(jnp.bfloat16), prepared["w_ih_t"],
                     preferred_element_type=jnp.float32)
             + jnp.dot(h0.astype(jnp.bfloat16), prepared["w_hh_t"],
                       preferred_element_type=jnp.float32)
             + prepared["b_gates"])
    i_g = _sig(gates[:, 0 * H:1 * H])
    f_g = _sig(gates[:, 1 * H:2 * H])
    g_g = jnp.tanh(gates[:, 2 * H:3 * H])
    o_g = _sig(gates[:, 3 * H:4 * H])
    c1 = f_g * c0 + i_g * g_g
    h1 = o_g * jnp.tanh(c1)
    val = jnp.sum(h1 * prepared["w_fc"], axis=-1) + prepared["b_fc"][0]
    return val, h1, c1


if __name__ == "__main__":
    # Small shapes consistent with the module (state_dim scaled down; hidden = module default).
    B, STATE_DIM, HIDDEN, T = 2, 256, 128, 8

    key = jax.random.PRNGKey(0)
    k_param, k_state, k_roll = jax.random.split(key, 3)
    params = init_params(k_param, STATE_DIM, HIDDEN)
    prepared = prepare_params(params)                       # one-time layout / bf16 cast
    state = jax.random.normal(k_state, (B, STATE_DIM), jnp.float32)

    # --- Step 1: default (zero) hidden state -------------------------------------
    value, (h_new, c_new) = lstm_critic_forward(state, prepared)
    jax.block_until_ready((value, h_new, c_new))

    h0z = jnp.zeros((B, HIDDEN), jnp.float32)
    c0z = jnp.zeros((B, HIDDEN), jnp.float32)
    ref_val, ref_h, ref_c = reference_step(state, h0z, c0z, prepared)
    assert value.shape == (B,)
    assert h_new.shape == (1, B, HIDDEN) and c_new.shape == (1, B, HIDDEN)
    assert jnp.allclose(value, ref_val, atol=2e-4, rtol=2e-4)
    assert jnp.allclose(h_new[0], ref_h, atol=2e-4, rtol=2e-4)
    assert jnp.allclose(c_new[0], ref_c, atol=2e-4, rtol=2e-4)

    # --- Step 2: feed the returned hidden state back (recurrent path) ------------
    value2, (h2, c2) = lstm_critic_forward(state, prepared, hidden=(h_new, c_new))
    jax.block_until_ready((value2, h2, c2))
    ref_val2, ref_h2, ref_c2 = reference_step(state, ref_h, ref_c, prepared)
    assert jnp.allclose(value2, ref_val2, atol=2e-4, rtol=2e-4)
    assert jnp.allclose(h2[0], ref_h2, atol=2e-4, rtol=2e-4)
    assert jnp.allclose(c2[0], ref_c2, atol=2e-4, rtol=2e-4)

    # --- Multi-step rollout: time loop inside the kernel, weights loaded once ----
    states_tbd = jax.random.normal(k_roll, (T, B, STATE_DIM), jnp.float32)
    values_roll, (h_roll, c_roll) = lstm_critic_rollout(states_tbd, prepared)
    jax.block_until_ready((values_roll, h_roll, c_roll))

    h_ref, c_ref = h0z, c0z
    ref_vals = []
    for t in range(T):
        v_t, h_ref, c_ref = reference_step(states_tbd[t], h_ref, c_ref, prepared)
        ref_vals.append(v_t)
    ref_vals = jnp.stack(ref_vals, axis=0)
    assert values_roll.shape == (T, B)
    assert jnp.allclose(values_roll, ref_vals, atol=1e-3, rtol=1e-3)
    assert jnp.allclose(h_roll[0], h_ref, atol=1e-3, rtol=1e-3)
    assert jnp.allclose(c_roll[0], c_ref, atol=1e-3, rtol=1e-3)

    print("KERNEL_OK")
</pallas_src>

<mosaic_0001>
module attributes {stable_mosaic.version = 11 : i64} {
  func.func @lstm_critic_kernel(%arg0: i32, %arg1: memref<1x2x256xf32, #tpu.memory_space<vmem>>, %arg2: memref<2x128xf32, #tpu.memory_space<vmem>>, %arg3: memref<2x128xf32, #tpu.memory_space<vmem>>, %arg4: memref<256x512xbf16, #tpu.memory_space<vmem>>, %arg5: memref<128x512xbf16, #tpu.memory_space<vmem>>, %arg6: memref<1x512xf32, #tpu.memory_space<vmem>>, %arg7: memref<1x128xf32, #tpu.memory_space<vmem>>, %arg8: memref<1xf32, #tpu.memory_space<smem>>, %arg9: memref<1x2x1xf32, #tpu.memory_space<vmem>>, %arg10: memref<2x128xf32, #tpu.memory_space<vmem>>, %arg11: memref<2x128xf32, #tpu.memory_space<vmem>>) attributes {dimension_semantics = [#tpu.dimension_semantics<arbitrary>], iteration_bounds = array<i64: 1>, scalar_prefetch = 0 : i64, scratch_operands = 0 : i64, tpu.core_type = #tpu.core_type<tc>, window_params = [{transform_indices = @transform_0, window_bounds = array<i64: 1, 2, 256>}, {pipeline_mode = #tpu.pipeline_mode<synchronous>, transform_indices = @transform_1, window_bounds = array<i64: 2, 128>}, {pipeline_mode = #tpu.pipeline_mode<synchronous>, transform_indices = @transform_2, window_bounds = array<i64: 2, 128>}, {pipeline_mode = #tpu.pipeline_mode<synchronous>, transform_indices = @transform_3, window_bounds = array<i64: 256, 512>}, {pipeline_mode = #tpu.pipeline_mode<synchronous>, transform_indices = @transform_4, window_bounds = array<i64: 128, 512>}, {pipeline_mode = #tpu.pipeline_mode<synchronous>, transform_indices = @transform_5, window_bounds = array<i64: 1, 512>}, {pipeline_mode = #tpu.pipeline_mode<synchronous>, transform_indices = @transform_6, window_bounds = array<i64: 1, 128>}, {transform_indices = @transform_7, window_bounds = array<i64: 1>}, {transform_indices = @transform_8, window_bounds = array<i64: 1, 2, 1>}, {pipeline_mode = #tpu.pipeline_mode<synchronous>, transform_indices = @transform_9, window_bounds = array<i64: 2, 128>}, {pipeline_mode = #tpu.pipeline_mode<synchronous>, transform_indices = @transform_10, window_bounds = array<i64: 2, 128>}]} {
    %c0_i32 = arith.constant 0 : i32
    %0 = arith.cmpi eq, %arg0, %c0_i32 : i32
    %1 = arith.extui %0 : i1 to i32
    %c0_i32_0 = arith.constant 0 : i32
    %2 = arith.cmpi ne, %1, %c0_i32_0 : i32
    scf.if %2 {
      %c0_34 = arith.constant 0 : index
      %c0_35 = arith.constant 0 : index
      %61 = vector.load %arg2[%c0_34, %c0_35] : memref<2x128xf32, #tpu.memory_space<vmem>>, vector<2x128xf32>
      %c0_36 = arith.constant 0 : index
      %c0_37 = arith.constant 0 : index
      %62 = vector.load %arg10[%c0_36, %c0_37] : memref<2x128xf32, #tpu.memory_space<vmem>>, vector<2x128xf32>
      tpu.vector_store %arg10[%c0_36, %c0_37], %61 {strides = array<i32>} : memref<2x128xf32, #tpu.memory_space<vmem>>, vector<2x128xf32>,
      %c0_38 = arith.constant 0 : index
      %c0_39 = arith.constant 0 : index
      %63 = vector.load %arg3[%c0_38, %c0_39] : memref<2x128xf32, #tpu.memory_space<vmem>>, vector<2x128xf32>
      %c0_40 = arith.constant 0 : index
      %c0_41 = arith.constant 0 : index
      %64 = vector.load %arg11[%c0_40, %c0_41] : memref<2x128xf32, #tpu.memory_space<vmem>>, vector<2x128xf32>
      tpu.vector_store %arg11[%c0_40, %c0_41], %63 {strides = array<i32>} : memref<2x128xf32, #tpu.memory_space<vmem>>, vector<2x128xf32>,
    } else {
    }
    %c0 = arith.constant 0 : index
    %c0_1 = arith.constant 0 : index
    %c0_2 = arith.constant 0 : index
    %3 = vector.load %arg1[%c0, %c0_1, %c0_2] : memref<1x2x256xf32, #tpu.memory_space<vmem>>, vector<1x2x256xf32>
    %4 = vector.shape_cast %3 : vector<1x2x256xf32> to vector<2x256xf32>
    %5 = arith.truncf %4 : vector<2x256xf32> to vector<2x256xbf16>
    %c0_3 = arith.constant 0 : index
    %c0_4 = arith.constant 0 : index
    %6 = vector.load %arg10[%c0_3, %c0_4] : memref<2x128xf32, #tpu.memory_space<vmem>>, vector<2x128xf32>
    %7 = arith.truncf %6 : vector<2x128xf32> to vector<2x128xbf16>
    %c0_5 = arith.constant 0 : index
    %c0_6 = arith.constant 0 : index
    %8 = vector.load %arg4[%c0_5, %c0_6] : memref<256x512xbf16, #tpu.memory_space<vmem>>, vector<256x512xbf16>
    %cst = arith.constant dense<0.000000e+00> : vector<2x512xf32>
    %9 = tpu.matmul %5, %8, %cst {dimension_numbers = #tpu.dot_dimension_numbers<[1], [0], [0], [1], [0, 0, 1, 1], [], []>} : vector<2x256xbf16>, vector<256x512xbf16>, vector<2x512xf32> -> vector<2x512xf32>
    %c0_7 = arith.constant 0 : index
    %c0_8 = arith.constant 0 : index
    %10 = vector.load %arg5[%c0_7, %c0_8] : memref<128x512xbf16, #tpu.memory_space<vmem>>, vector<128x512xbf16>
    %cst_9 = arith.constant dense<0.000000e+00> : vector<2x512xf32>
    %11 = tpu.matmul %7, %10, %cst_9 {dimension_numbers = #tpu.dot_dimension_numbers<[1], [0], [0], [1], [0, 0, 1, 1], [], []>} : vector<2x128xbf16>, vector<128x512xbf16>, vector<2x512xf32> -> vector<2x512xf32>
    %12 = arith.addf %9, %11 : vector<2x512xf32>
    %c0_10 = arith.constant 0 : index
    %c0_11 = arith.constant 0 : index
    %13 = vector.load %arg6[%c0_10, %c0_11] : memref<1x512xf32, #tpu.memory_space<vmem>>, vector<1x512xf32>
    %14 = vector.broadcast %13 : vector<1x512xf32> to vector<2x512xf32>
    %15 = arith.addf %12, %14 : vector<2x512xf32>
    %16 = vector.extract_strided_slice %15 {offsets = [0, 0], sizes = [2, 128], strides = [1, 1]} : vector<2x512xf32> to vector<2x128xf32>
    %cst_12 = arith.constant 5.000000e-01 : f32
    %17 = vector.broadcast %cst_12 : f32 to vector<2x128xf32>
    %18 = arith.mulf %17, %16 : vector<2x128xf32>
    %19 = math.tanh %18 : vector<2x128xf32>
    %cst_13 = arith.constant 1.000000e+00 : f32
    %20 = vector.broadcast %cst_13 : f32 to vector<2x128xf32>
    %21 = arith.addf %19, %20 : vector<2x128xf32>
    %cst_14 = arith.constant 5.000000e-01 : f32
    %22 = vector.broadcast %cst_14 : f32 to vector<2x128xf32>
    %23 = arith.mulf %22, %21 : vector<2x128xf32>
    %24 = vector.extract_strided_slice %15 {offsets = [0, 128], sizes = [2, 128], strides = [1, 1]} : vector<2x512xf32> to vector<2x128xf32>
    %cst_15 = arith.constant 5.000000e-01 : f32
    %25 = vector.broadcast %cst_15 : f32 to vector<2x128xf32>
    %26 = arith.mulf %25, %24 : vector<2x128xf32>
    %27 = math.tanh %26 : vector<2x128xf32>
    %cst_16 = arith.constant 1.000000e+00 : f32
    %28 = vector.broadcast %cst_16 : f32 to vector<2x128xf32>
    %29 = arith.addf %27, %28 : vector<2x128xf32>
    %cst_17 = arith.constant 5.000000e-01 : f32
    %30 = vector.broadcast %cst_17 : f32 to vector<2x128xf32>
    %31 = arith.mulf %30, %29 : vector<2x128xf32>
    %32 = vector.extract_strided_slice %15 {offsets = [0, 256], sizes = [2, 128], strides = [1, 1]} : vector<2x512xf32> to vector<2x128xf32>
    %33 = math.tanh %32 : vector<2x128xf32>
    %34 = vector.extract_strided_slice %15 {offsets = [0, 384], sizes = [2, 128], strides = [1, 1]} : vector<2x512xf32> to vector<2x128xf32>
    %cst_18 = arith.constant 5.000000e-01 : f32
    %35 = vector.broadcast %cst_18 : f32 to vector<2x128xf32>
    %36 = arith.mulf %35, %34 : vector<2x128xf32>
    %37 = math.tanh %36 : vector<2x128xf32>
    %cst_19 = arith.constant 1.000000e+00 : f32
    %38 = vector.broadcast %cst_19 : f32 to vector<2x128xf32>
    %39 = arith.addf %37, %38 : vector<2x128xf32>
    %cst_20 = arith.constant 5.000000e-01 : f32
    %40 = vector.broadcast %cst_20 : f32 to vector<2x128xf32>
    %41 = arith.mulf %40, %39 : vector<2x128xf32>
    %c0_21 = arith.constant 0 : index
    %c0_22 = arith.constant 0 : index
    %42 = vector.load %arg11[%c0_21, %c0_22] : memref<2x128xf32, #tpu.memory_space<vmem>>, vector<2x128xf32>
    %43 = arith.mulf %31, %42 : vector<2x128xf32>
    %44 = arith.mulf %23, %33 : vector<2x128xf32>
    %45 = arith.addf %43, %44 : vector<2x128xf32>
    %46 = math.tanh %45 : vector<2x128xf32>
    %47 = arith.mulf %41, %46 : vector<2x128xf32>
    %c0_23 = arith.constant 0 : index
    %c0_24 = arith.constant 0 : index
    %48 = vector.load %arg11[%c0_23, %c0_24] : memref<2x128xf32, #tpu.memory_space<vmem>>, vector<2x128xf32>
    tpu.vector_store %arg11[%c0_23, %c0_24], %45 {strides = array<i32>} : memref<2x128xf32, #tpu.memory_space<vmem>>, vector<2x128xf32>,
    %c0_25 = arith.constant 0 : index
    %c0_26 = arith.constant 0 : index
    %49 = vector.load %arg10[%c0_25, %c0_26] : memref<2x128xf32, #tpu.memory_space<vmem>>, vector<2x128xf32>
    tpu.vector_store %arg10[%c0_25, %c0_26], %47 {strides = array<i32>} : memref<2x128xf32, #tpu.memory_space<vmem>>, vector<2x128xf32>,
    %c0_27 = arith.constant 0 : index
    %c0_28 = arith.constant 0 : index
    %50 = vector.load %arg7[%c0_27, %c0_28] : memref<1x128xf32, #tpu.memory_space<vmem>>, vector<1x128xf32>
    %51 = vector.broadcast %50 : vector<1x128xf32> to vector<2x128xf32>
    %52 = arith.mulf %47, %51 : vector<2x128xf32>
    %cst_29 = arith.constant dense<0.000000e+00> : vector<2xf32>
    %53 = vector.multi_reduction <add>, %52, %cst_29 [1] : vector<2x128xf32> to vector<2xf32>
    %54 = vector.shape_cast %53 : vector<2xf32> to vector<2x1xf32>
    %c0_30 = arith.constant 0 : index
    %55 = memref.load %arg8[%c0_30] : memref<1xf32, #tpu.memory_space<smem>>
    %56 = vector.broadcast %55 : f32 to vector<2x1xf32>
    %57 = arith.addf %54, %56 : vector<2x1xf32>
    %c0_31 = arith.constant 0 : index
    %c0_32 = arith.constant 0 : index
    %c0_33 = arith.constant 0 : index
    %58 = vector.load %arg9[%c0_31, %c0_32, %c0_33] : memref<1x2x1xf32, #tpu.memory_space<vmem>>, vector<1x2x1xf32>
    %59 = vector.shape_cast %58 : vector<1x2x1xf32> to vector<2x1xf32>
    %60 = vector.shape_cast %57 : vector<2x1xf32> to vector<1x2x1xf32>
    tpu.vector_store %arg9[%c0_31, %c0_32, %c0_33], %60 {strides = array<i32>} : memref<1x2x1xf32, #tpu.memory_space<vmem>>, vector<1x2x1xf32>,
    return
  }
  func.func @transform_0(%arg0: i32) -> (i32, i32, i32) {
    %c0_i32 = arith.constant 0 : i32
    %c0_i32_0 = arith.constant 0 : i32
    %c0_i32_1 = arith.constant 0 : i32
    return %arg0, %c0_i32, %c0_i32_0 : i32, i32, i32
  }
  func.func @transform_1(%arg0: i32) -> (i32, i32) {
    %c0_i32 = arith.constant 0 : i32
    %c0_i32_0 = arith.constant 0 : i32
    %c0_i32_1 = arith.constant 0 : i32
    return %c0_i32, %c0_i32_0 : i32, i32
  }
  func.func @transform_2(%arg0: i32) -> (i32, i32) {
    %c0_i32 = arith.constant 0 : i32
    %c0_i32_0 = arith.constant 0 : i32
    %c0_i32_1 = arith.constant 0 : i32
    return %c0_i32, %c0_i32_0 : i32, i32
  }
  func.func @transform_3(%arg0: i32) -> (i32, i32) {
    %c0_i32 = arith.constant 0 : i32
    %c0_i32_0 = arith.constant 0 : i32
    %c0_i32_1 = arith.constant 0 : i32
    return %c0_i32, %c0_i32_0 : i32, i32
  }
  func.func @transform_4(%arg0: i32) -> (i32, i32) {
    %c0_i32 = arith.constant 0 : i32
    %c0_i32_0 = arith.constant 0 : i32
    %c0_i32_1 = arith.constant 0 : i32
    return %c0_i32, %c0_i32_0 : i32, i32
  }
  func.func @transform_5(%arg0: i32) -> (i32, i32) {
    %c0_i32 = arith.constant 0 : i32
    %c0_i32_0 = arith.constant 0 : i32
    %c0_i32_1 = arith.constant 0 : i32
    return %c0_i32, %c0_i32_0 : i32, i32
  }
  func.func @transform_6(%arg0: i32) -> (i32, i32) {
    %c0_i32 = arith.constant 0 : i32
    %c0_i32_0 = arith.constant 0 : i32
    %c0_i32_1 = arith.constant 0 : i32
    return %c0_i32, %c0_i32_0 : i32, i32
  }
  func.func @transform_7(%arg0: i32) -> i32 {
    %c0_i32 = arith.constant 0 : i32
    %c0_i32_0 = arith.constant 0 : i32
    return %c0_i32 : i32
  }
  func.func @transform_8(%arg0: i32) -> (i32, i32, i32) {
    %c0_i32 = arith.constant 0 : i32
    %c0_i32_0 = arith.constant 0 : i32
    %c0_i32_1 = arith.constant 0 : i32
    return %arg0, %c0_i32, %c0_i32_0 : i32, i32, i32
  }
  func.func @transform_9(%arg0: i32) -> (i32, i32) {
    %c0_i32 = arith.constant 0 : i32
    %c0_i32_0 = arith.constant 0 : i32
    %c0_i32_1 = arith.constant 0 : i32
    return %c0_i32, %c0_i32_0 : i32, i32
  }
  func.func @transform_10(%arg0: i32) -> (i32, i32) {
    %c0_i32 = arith.constant 0 : i32
    %c0_i32_0 = arith.constant 0 : i32
    %c0_i32_1 = arith.constant 0 : i32
    return %c0_i32, %c0_i32_0 : i32, i32
  }
}

</mosaic_0001>

<llo_original>
// kernel: tpu_custom_call.1
$region0: #{tpu_custom_call.1}
  #allocation0 [shape = 'u32[]', space=smem, size = 0x4, offset = 0x4, fixed_abs, tag = 'smem constant byte address 0x4 - core index']
  #allocation1 [shape = 'u32[72,128]{1,0:T(1,128)}', space=vmem, size = 0x9000, scoped, tag = 'internal scratch']
  #allocation2 [shape = 'f32[1]{0:T(128)S(6)}', space=smem, size = 0x200, scoped, tag = 'scoped memory for tpu_custom_call.1']
  %s0 = inlined_call_operand.vmem [shape: f32[1,2,256], index: 0, kind: input, shape index: {}]
  %s1 = inlined_call_operand.vmem [shape: f32[2,128], index: 1, kind: input, shape index: {}, may-alias: {1,9}]
  %s2 = inlined_call_operand.vmem [shape: f32[2,128], index: 2, kind: input, shape index: {}, may-alias: {2,10}]
  %s3 = inlined_call_operand.hbm [shape: bf16[256,512], index: 3, kind: input, shape index: {}]
  %s4 = inlined_call_operand.hbm [shape: bf16[128,512], index: 4, kind: input, shape index: {}]
  %s5 = inlined_call_operand.hbm [shape: f32[1,512], index: 5, kind: input, shape index: {}]
  %s6 = inlined_call_operand.vmem [shape: f32[1,128], index: 6, kind: input, shape index: {}]
  %s7 = inlined_call_operand.<no memory space> [shape: f32[1], index: 7, kind: input, shape index: {}]
  %s8 = inlined_call_operand.vmem [shape: f32[1,2,1], index: 8, kind: output, shape index: {0}]
  %s9 = inlined_call_operand.vmem [shape: f32[2,128], index: 9, kind: output, shape index: {1}, may-alias: {1,9}]
  %s10 = inlined_call_operand.vmem [shape: f32[2,128], index: 10, kind: output, shape index: {2}, may-alias: {2,10}]
  %11 = xla_tuple %s8, %s9, %s10
  %s12 = sld [smem:[#allocation0]]
  $region74: #{tpu_custom_call.1} parent=0
    _
  %s14 = ssub.s32 1, %s12
  %s15 = scalar_select 0, %s14, %s12
  %16 = sst [smem:[#allocation2]] %s7
  $region1: #{tpu_custom_call.1} parent=0
    #allocation3 [shape = 'u8[262144]{0}', space=vmem, size = 0x40000, scoped, tag = 'input window, operand 3, single buffered']
    #allocation4 [shape = 's32[1]{0}', space=sflag, size = 0x4, scoped, tag = 'scoped memory for tpu_custom_call.1']
    #allocation5 [shape = 'u8[131072]{0}', space=vmem, size = 0x20000, scoped, tag = 'input window, operand 4, single buffered']
    #allocation6 [shape = 's32[1]{0}', space=sflag, size = 0x4, scoped, tag = 'scoped memory for tpu_custom_call.1']
    #allocation7 [shape = 'u8[2048]{0}', space=vmem, size = 0x800, scoped, tag = 'input window, operand 5, single buffered']
    %17 = vsyncpa [#allocation4], 0
    %18 = vsyncpa [#allocation6], 0
    // Predicated region
    $region2: #{tpu_custom_call.1} parent=1 // pred_check
      _
    $region3: #{tpu_custom_call.1} parent=1 // pred_check_branch
      %20 = sbr.rel (0) target = $region5
    $region4: #{tpu_custom_call.1} parent=1 // pred_region
      _
    $region5: #{tpu_custom_call.1} parent=1 // pred_fallthru
      _
    // Predicated region
    $region6: #{tpu_custom_call.1} parent=1 // pred_check
      _
    $region7: #{tpu_custom_call.1} parent=1 // pred_check_branch
      %22 = sbr.rel (0) target = $region9
    $region8: #{tpu_custom_call.1} parent=1 // pred_region
      _
    $region9: #{tpu_custom_call.1} parent=1 // pred_fallthru
      _
    // Predicated region
    $region10: #{tpu_custom_call.1} parent=1 // pred_check
      _
    $region11: #{tpu_custom_call.1} parent=1 // pred_check_branch
      %24 = sbr.rel (0) target = $region13
    $region12: #{tpu_custom_call.1} parent=1 // pred_region
      _
    $region13: #{tpu_custom_call.1} parent=1 // pred_fallthru
      _
    // Predicated region
    $region14: #{tpu_custom_call.1} parent=1 // pred_check
      _
    $region15: #{tpu_custom_call.1} parent=1 // pred_check_branch
      %26 = sbr.rel (0) target = $region17
    $region16: #{tpu_custom_call.1} parent=1 // pred_region
      %28 = vsyncadd [#allocation4], 0
      %s29 = sshll.u32 %s3, 4
      %s30 = int_to_ptr.hbm [resolvable:$true] %s29
      %s31 = sshll.u32 [#allocation3], 4
      %s32 = int_to_ptr.vmem [resolvable:$true] %s31
      %37 = dma.hbm_to_vmem [thread:$0]  %s30, 8192, %s32, [#allocation4], 256, 256, 16
    $region17: #{tpu_custom_call.1} parent=1 // pred_fallthru
      _
    // Predicated region
    $region18: #{tpu_custom_call.1} parent=1 // pred_check
      _
    $region19: #{tpu_custom_call.1} parent=1 // pred_check_branch
      %39 = sbr.rel (0) target = $region21
    $region20: #{tpu_custom_call.1} parent=1 // pred_region
      %41 = vsyncadd [#allocation6], 0
      %s42 = sshll.u32 %s4, 4
      %s43 = int_to_ptr.hbm [resolvable:$true] %s42
      %s44 = sshll.u32 [#allocation5], 4
      %s45 = int_to_ptr.vmem [resolvable:$true] %s44
      %50 = dma.hbm_to_vmem [thread:$0]  %s43, 4096, %s45, [#allocation6], 256, 256, 16
    $region21: #{tpu_custom_call.1} parent=1 // pred_fallthru
      _
    // Predicated region
    $region22: #{tpu_custom_call.1} parent=1 // pred_check
      _
    $region23: #{tpu_custom_call.1} parent=1 // pred_check_branch
      %52 = sbr.rel (0) target = $region25
    $region24: #{tpu_custom_call.1} parent=1 // pred_region
      %54 = vsyncadd [#allocation6], 0
      %s56 = sshll.u32 %s5, 4
      %s57 = int_to_ptr.hbm [resolvable:$true] %s56
      %s58 = sshll.u32 [#allocation7], 4
      %s59 = int_to_ptr.vmem [resolvable:$true] %s58
      %61 = dma.hbm_to_vmem [thread:$0]  %s57, 64, %s59, [#allocation6]
    $region25: #{tpu_custom_call.1} parent=1 // pred_fallthru
      _
    // Predicated region
    $region26: #{tpu_custom_call.1} parent=1 // pred_check
      _
    $region27: #{tpu_custom_call.1} parent=1 // pred_check_branch
      %63 = sbr.rel (0) target = $region29
    $region28: #{tpu_custom_call.1} parent=1 // pred_region
      _
    $region29: #{tpu_custom_call.1} parent=1 // pred_fallthru
      _
    // Predicated region
    $region30: #{tpu_custom_call.1} parent=1 // pred_check
      _
    $region31: #{tpu_custom_call.1} parent=1 // pred_check_branch
      %65 = sbr.rel (0) target = $region33
    $region32: #{tpu_custom_call.1} parent=1 // pred_region
      _
    $region33: #{tpu_custom_call.1} parent=1 // pred_fallthru
      _
    // Predicated region
    $region34: #{tpu_custom_call.1} parent=1 // pred_check
      _
    $region35: #{tpu_custom_call.1} parent=1 // pred_check_branch
      %67 = sbr.rel (0) target = $region37
    $region36: #{tpu_custom_call.1} parent=1 // pred_region
      %69 = dma.done [#allocation4], 8192
    $region37: #{tpu_custom_call.1} parent=1 // pred_fallthru
      _
    // Predicated region
    $region38: #{tpu_custom_call.1} parent=1 // pred_check
      _
    $region39: #{tpu_custom_call.1} parent=1 // pred_check_branch
      %71 = sbr.rel (0) target = $region41
    $region40: #{tpu_custom_call.1} parent=1 // pred_region
      %73 = dma.done [#allocation6], 4096
    $region41: #{tpu_custom_call.1} parent=1 // pred_fallthru
      _
    // Predicated region
    $region42: #{tpu_custom_call.1} parent=1 // pred_check
      _
    $region43: #{tpu_custom_call.1} parent=1 // pred_check_branch
      %75 = sbr.rel (0) target = $region45
    $region44: #{tpu_custom_call.1} parent=1 // pred_region
      %77 = dma.done [#allocation6], 64
    $region45: #{tpu_custom_call.1} parent=1 // pred_fallthru
      _
    %p78 = scmp.eq.s32.totalorder 0, 0
    // Predicated region
    $region46: #{tpu_custom_call.1} parent=1 // pred_check
      %p79 = pneg %p78
    $region47: #{tpu_custom_call.1} parent=1 // pred_check_branch
      %81 = sbr.rel (%p79) target = $region49
    $region48: #{tpu_custom_call.1} parent=1 // pred_region
      %v82 = vld [vmem:[%s1] sm:$0x3]
      %83 = vst [vmem:[%s9] sm:$0x3] %v82
      %v84 = vld [vmem:[%s2] sm:$0x3]
      %85 = vst [vmem:[%s10] sm:$0x3] %v84
    $region49: #{tpu_custom_call.1} parent=1 // pred_fallthru
      _
    %v86 = vld [vmem:[%s0] sm:$0xf]
    %88 = vst [vmem:[#allocation1] ss:$4 sm:$0xff] %v86
    %v89 = vld.sshfl [vmem:[#allocation1] sm:$0xff pattern:$0x73625140]
    %v90 = vld.sshfl [vmem:[#allocation1 + $0x8] sm:$0xff pattern:$0x73625140]
    %v93 = vpack.c.bf16 %v89, %v89
    %v94 = vpack.c.bf16 %v90, %v90
    %v95 = vld [vmem:[%s9] sm:$0x3]
    %v96 = vpack.c.bf16 %v95, %v95
    %v97 = vld [vmem:[#allocation3] sm:$0xff]
    %v98 = vld [vmem:[#allocation3 + $0x8] sm:$0xff]
    %v99 = vld [vmem:[#allocation3 + $0x10] sm:$0xff]
    %v100 = vld [vmem:[#allocation3 + $0x18] sm:$0xff]
    %v101 = vld [vmem:[#allocation3 + $0x20] sm:$0xff]
    %v102 = vld [vmem:[#allocation3 + $0x28] sm:$0xff]
    %v103 = vld [vmem:[#allocation3 + $0x30] sm:$0xff]
    %v104 = vld [vmem:[#allocation3 + $0x38] sm:$0xff]
    %v105 = vld [vmem:[#allocation3 + $0x40] sm:$0xff]
    %v106 = vld [vmem:[#allocation3 + $0x48] sm:$0xff]
    %v107 = vld [vmem:[#allocation3 + $0x50] sm:$0xff]
    %v108 = vld [vmem:[#allocation3 + $0x58] sm:$0xff]
    %v109 = vld [vmem:[#allocation3 + $0x60] sm:$0xff]
    %v110 = vld [vmem:[#allocation3 + $0x68] sm:$0xff]
    %v111 = vld [vmem:[#allocation3 + $0x70] sm:$0xff]
    %v112 = vld [vmem:[#allocation3 + $0x78] sm:$0xff]
    %v113 = vld [vmem:[#allocation3 + $0x80] sm:$0xff]
    %v114 = vld [vmem:[#allocation3 + $0x88] sm:$0xff]
    %v115 = vld [vmem:[#allocation3 + $0x90] sm:$0xff]
    %v116 = vld [vmem:[#allocation3 + $0x98] sm:$0xff]
    %v117 = vld [vmem:[#allocation3 + $0xa0] sm:$0xff]
    %v118 = vld [vmem:[#allocation3 + $0xa8] sm:$0xff]
    %v119 = vld [vmem:[#allocation3 + $0xb0] sm:$0xff]
    %v120 = vld [vmem:[#allocation3 + $0xb8] sm:$0xff]
    %v121 = vld [vmem:[#allocation3 + $0xc0] sm:$0xff]
    %v122 = vld [vmem:[#allocation3 + $0xc8] sm:$0xff]
    %v123 = vld [vmem:[#allocation3 + $0xd0] sm:$0xff]
    %v124 = vld [vmem:[#allocation3 + $0xd8] sm:$0xff]
    %v125 = vld [vmem:[#allocation3 + $0xe0] sm:$0xff]
    %v126 = vld [vmem:[#allocation3 + $0xe8] sm:$0xff]
    %v127 = vld [vmem:[#allocation3 + $0xf0] sm:$0xff]
    %v128 = vld [vmem:[#allocation3 + $0xf8] sm:$0xff]
    %v129 = vld [vmem:[#allocation3 + $0x100] sm:$0xff]
    %v130 = vld [vmem:[#allocation3 + $0x108] sm:$0xff]
    %v131 = vld [vmem:[#allocation3 + $0x110] sm:$0xff]
    %v132 = vld [vmem:[#allocation3 + $0x118] sm:$0xff]
    %v133 = vld [vmem:[#allocation3 + $0x120] sm:$0xff]
    %v134 = vld [vmem:[#allocation3 + $0x128] sm:$0xff]
    %v135 = vld [vmem:[#allocation3 + $0x130] sm:$0xff]
    %v136 = vld [vmem:[#allocation3 + $0x138] sm:$0xff]
    %v137 = vld [vmem:[#allocation3 + $0x140] sm:$0xff]
    %v138 = vld [vmem:[#allocation3 + $0x148] sm:$0xff]
    %v139 = vld [vmem:[#allocation3 + $0x150] sm:$0xff]
    %v140 = vld [vmem:[#allocation3 + $0x158] sm:$0xff]
    %v141 = vld [vmem:[#allocation3 + $0x160] sm:$0xff]
    %v142 = vld [vmem:[#allocation3 + $0x168] sm:$0xff]
    %v143 = vld [vmem:[#allocation3 + $0x170] sm:$0xff]
    %v144 = vld [vmem:[#allocation3 + $0x178] sm:$0xff]
    %v145 = vld [vmem:[#allocation3 + $0x180] sm:$0xff]
    %v146 = vld [vmem:[#allocation3 + $0x188] sm:$0xff]
    %v147 = vld [vmem:[#allocation3 + $0x190] sm:$0xff]
    %v148 = vld [vmem:[#allocation3 + $0x198] sm:$0xff]
    %v149 = vld [vmem:[#allocation3 + $0x1a0] sm:$0xff]
    %v150 = vld [vmem:[#allocation3 + $0x1a8] sm:$0xff]
    %v151 = vld [vmem:[#allocation3 + $0x1b0] sm:$0xff]
    %v152 = vld [vmem:[#allocation3 + $0x1b8] sm:$0xff]
    %v153 = vld [vmem:[#allocation3 + $0x1c0] sm:$0xff]
    %v154 = vld [vmem:[#allocation3 + $0x1c8] sm:$0xff]
    %v155 = vld [vmem:[#allocation3 + $0x1d0] sm:$0xff]
    %v156 = vld [vmem:[#allocation3 + $0x1d8] sm:$0xff]
    %v157 = vld [vmem:[#allocation3 + $0x1e0] sm:$0xff]
    %v158 = vld [vmem:[#allocation3 + $0x1e8] sm:$0xff]
    %v159 = vld [vmem:[#allocation3 + $0x1f0] sm:$0xff]
    %v160 = vld [vmem:[#allocation3 + $0x1f8] sm:$0xff]
    %v161 = vld [vmem:[#allocation5] sm:$0xff]
    %v162 = vld [vmem:[#allocation5 + $0x8] sm:$0xff]
    %v163 = vld [vmem:[#allocation5 + $0x10] sm:$0xff]
    %v164 = vld [vmem:[#allocation5 + $0x18] sm:$0xff]
    %v165 = vld [vmem:[#allocation5 + $0x20] sm:$0xff]
    %v166 = vld [vmem:[#allocation5 + $0x28] sm:$0xff]
    %v167 = vld [vmem:[#allocation5 + $0x30] sm:$0xff]
    %v168 = vld [vmem:[#allocation5 + $0x38] sm:$0xff]
    %v169 = vld [vmem:[#allocation5 + $0x40] sm:$0xff]
    %v170 = vld [vmem:[#allocation5 + $0x48] sm:$0xff]
    %v171 = vld [vmem:[#allocation5 + $0x50] sm:$0xff]
    %v172 = vld [vmem:[#allocation5 + $0x58] sm:$0xff]
    %v173 = vld [vmem:[#allocation5 + $0x60] sm:$0xff]
    %v174 = vld [vmem:[#allocation5 + $0x68] sm:$0xff]
    %v175 = vld [vmem:[#allocation5 + $0x70] sm:$0xff]
    %v176 = vld [vmem:[#allocation5 + $0x78] sm:$0xff]
    %v177 = vld [vmem:[#allocation5 + $0x80] sm:$0xff]
    %v178 = vld [vmem:[#allocation5 + $0x88] sm:$0xff]
    %v179 = vld [vmem:[#allocation5 + $0x90] sm:$0xff]
    %v180 = vld [vmem:[#allocation5 + $0x98] sm:$0xff]
    %v181 = vld [vmem:[#allocation5 + $0xa0] sm:$0xff]
    %v182 = vld [vmem:[#allocation5 + $0xa8] sm:$0xff]
    %v183 = vld [vmem:[#allocation5 + $0xb0] sm:$0xff]
    %v184 = vld [vmem:[#allocation5 + $0xb8] sm:$0xff]
    %v185 = vld [vmem:[#allocation5 + $0xc0] sm:$0xff]
    %v186 = vld [vmem:[#allocation5 + $0xc8] sm:$0xff]
    %v187 = vld [vmem:[#allocation5 + $0xd0] sm:$0xff]
    %v188 = vld [vmem:[#allocation5 + $0xd8] sm:$0xff]
    %v189 = vld [vmem:[#allocation5 + $0xe0] sm:$0xff]
    %v190 = vld [vmem:[#allocation5 + $0xe8] sm:$0xff]
    %v191 = vld [vmem:[#allocation5 + $0xf0] sm:$0xff]
    %v192 = vld [vmem:[#allocation5 + $0xf8] sm:$0xff]
    %v225 = vunpack.c.l.b16 %v161
    %v226 = vunpack.c.h.b16 %v161
    %v227 = vunpack.c.l.b16 %v162
    %v228 = vunpack.c.h.b16 %v162
    %v229 = vunpack.c.l.b16 %v163
    %v230 = vunpack.c.h.b16 %v163
    %v231 = vunpack.c.l.b16 %v164
    %v232 = vunpack.c.h.b16 %v164
    %v233 = vunpack.c.l.b16 %v165
    %v234 = vunpack.c.h.b16 %v165
    %v235 = vunpack.c.l.b16 %v166
    %v236 = vunpack.c.h.b16 %v166
    %v237 = vunpack.c.l.b16 %v167
    %v238 = vunpack.c.h.b16 %v167
    %v239 = vunpack.c.l.b16 %v168
    %v240 = vunpack.c.h.b16 %v168
    %v241 = vunpack.c.l.b16 %v169
    %v242 = vunpack.c.h.b16 %v169
    %v243 = vunpack.c.l.b16 %v170
    %v244 = vunpack.c.h.b16 %v170
    %v245 = vunpack.c.l.b16 %v171
    %v246 = vunpack.c.h.b16 %v171
    %v247 = vunpack.c.l.b16 %v172
    %v248 = vunpack.c.h.b16 %v172
    %v249 = vunpack.c.l.b16 %v173
    %v250 = vunpack.c.h.b16 %v173
    %v251 = vunpack.c.l.b16 %v174
    %v252 = vunpack.c.h.b16 %v174
    %v253 = vunpack.c.l.b16 %v175
    %v254 = vunpack.c.h.b16 %v175
    %v255 = vunpack.c.l.b16 %v176
    %v256 = vunpack.c.h.b16 %v176
    %v257 = vunpack.c.l.b16 %v177
    %v258 = vunpack.c.h.b16 %v177
    %v259 = vunpack.c.l.b16 %v178
    %v260 = vunpack.c.h.b16 %v178
    %v261 = vunpack.c.l.b16 %v179
    %v262 = vunpack.c.h.b16 %v179
    %v263 = vunpack.c.l.b16 %v180
    %v264 = vunpack.c.h.b16 %v180
    %v265 = vunpack.c.l.b16 %v181
    %v266 = vunpack.c.h.b16 %v181
    %v267 = vunpack.c.l.b16 %v182
    %v268 = vunpack.c.h.b16 %v182
    %v269 = vunpack.c.l.b16 %v183
    %v270 = vunpack.c.h.b16 %v183
    %v271 = vunpack.c.l.b16 %v184
    %v272 = vunpack.c.h.b16 %v184
    %v273 = vunpack.c.l.b16 %v185
    %v274 = vunpack.c.h.b16 %v185
    %v275 = vunpack.c.l.b16 %v186
    %v276 = vunpack.c.h.b16 %v186
    %v277 = vunpack.c.l.b16 %v187
    %v278 = vunpack.c.h.b16 %v187
    %v279 = vunpack.c.l.b16 %v188
    %v280 = vunpack.c.h.b16 %v188
    %v281 = vunpack.c.l.b16 %v189
    %v282 = vunpack.c.h.b16 %v189
    %v283 = vunpack.c.l.b16 %v190
    %v284 = vunpack.c.h.b16 %v190
    %v285 = vunpack.c.l.b16 %v191
    %v286 = vunpack.c.h.b16 %v191
    %v287 = vunpack.c.l.b16 %v192
    %v288 = vunpack.c.h.b16 %v192
    %v289 = vpack.c.b16 %v229, %v225
    %v290 = vpack.c.b16 %v230, %v226
    %v291 = vpack.c.b16 %v231, %v227
    %v292 = vpack.c.b16 %v232, %v228
    %v293 = vpack.c.b16 %v237, %v233
    %v294 = vpack.c.b16 %v238, %v234
    %v295 = vpack.c.b16 %v239, %v235
    %v296 = vpack.c.b16 %v240, %v236
    %v297 = vpack.c.b16 %v245, %v241
    %v298 = vpack.c.b16 %v246, %v242
    %v299 = vpack.c.b16 %v247, %v243
    %v300 = vpack.c.b16 %v248, %v244
    %v301 = vpack.c.b16 %v253, %v249
    %v302 = vpack.c.b16 %v254, %v250
    %v303 = vpack.c.b16 %v255, %v251
    %v304 = vpack.c.b16 %v256, %v252
    %v305 = vpack.c.b16 %v261, %v257
    %v306 = vpack.c.b16 %v262, %v258
    %v307 = vpack.c.b16 %v263, %v259
    %v308 = vpack.c.b16 %v264, %v260
    %v309 = vpack.c.b16 %v269, %v265
    %v310 = vpack.c.b16 %v270, %v266
    %v311 = vpack.c.b16 %v271, %v267
    %v312 = vpack.c.b16 %v272, %v268
    %v313 = vpack.c.b16 %v277, %v273
    %v314 = vpack.c.b16 %v278, %v274
    %v315 = vpack.c.b16 %v279, %v275
    %v316 = vpack.c.b16 %v280, %v276
    %v317 = vpack.c.b16 %v285, %v281
    %v318 = vpack.c.b16 %v286, %v282
    %v319 = vpack.c.b16 %v287, %v283
    %v320 = vpack.c.b16 %v288, %v284
    %353 = vmatpush.bf16.msra.mxu0 %v317
    %354 = vmatpush.bf16.msra.mxu0 %v313
    %355 = vmatpush.bf16.msra.mxu0 %v309
    %356 = vmatpush.bf16.msra.mxu0 %v305
    %357 = vmatpush.bf16.msra.mxu0 %v301
    %358 = vmatpush.bf16.msra.mxu0 %v297
    %359 = vmatpush.bf16.msra.mxu0 %v293
    %360 = vmatpush.bf16.msra.mxu0 %v289
    %361 = vmatmul.bf16.gmra.mxu0 %v96
    %v362 = vpop.f32.mrf.mxu0
    %v363 = vadd.f32 0.0, %v362
    %v364 = vpop.f32.mrf.mxu0
    %365 = vdwg.mxu0
    %366 = vmatpush.bf16.msra.mxu0 %v318
    %367 = vmatpush.bf16.msra.mxu0 %v314
    %368 = vmatpush.bf16.msra.mxu0 %v310
    %369 = vmatpush.bf16.msra.mxu0 %v306
    %370 = vmatpush.bf16.msra.mxu0 %v302
    %371 = vmatpush.bf16.msra.mxu0 %v298
    %372 = vmatpush.bf16.msra.mxu0 %v294
    %373 = vmatpush.bf16.msra.mxu0 %v290
    %374 = vmatmul.bf16.gmra.mxu0 %v96
    %v375 = vpop.f32.mrf.mxu0
    %v376 = vadd.f32 0.0, %v375
    %v377 = vpop.f32.mrf.mxu0
    %378 = vdwg.mxu0
    %379 = vmatpush.bf16.msra.mxu0 %v319
    %380 = vmatpush.bf16.msra.mxu0 %v315
    %381 = vmatpush.bf16.msra.mxu0 %v311
    %382 = vmatpush.bf16.msra.mxu0 %v307
    %383 = vmatpush.bf16.msra.mxu0 %v303
    %384 = vmatpush.bf16.msra.mxu0 %v299
    %385 = vmatpush.bf16.msra.mxu0 %v295
    %386 = vmatpush.bf16.msra.mxu0 %v291
    %387 = vmatmul.bf16.gmra.mxu0 %v96
    %v388 = vpop.f32.mrf.mxu0
    %v389 = vadd.f32 0.0, %v388
    %v390 = vpop.f32.mrf.mxu0
    %391 = vdwg.mxu0
    %392 = vmatpush.bf16.msra.mxu0 %v320
    %393 = vmatpush.bf16.msra.mxu0 %v316
    %394 = vmatpush.bf16.msra.mxu0 %v312
    %395 = vmatpush.bf16.msra.mxu0 %v308
    %396 = vmatpush.bf16.msra.mxu0 %v304
    %397 = vmatpush.bf16.msra.mxu0 %v300
    %398 = vmatpush.bf16.msra.mxu0 %v296
    %399 = vmatpush.bf16.msra.mxu0 %v292
    %400 = vmatmul.bf16.gmra.mxu0 %v96
    %v401 = vpop.f32.mrf.mxu0
    %v402 = vadd.f32 0.0, %v401
    %v403 = vpop.f32.mrf.mxu0
    %404 = vdwg.mxu0
    %v469 = vunpack.c.l.b16 %v97
    %v470 = vunpack.c.h.b16 %v97
    %v471 = vunpack.c.l.b16 %v98
    %v472 = vunpack.c.h.b16 %v98
    %v473 = vunpack.c.l.b16 %v99
    %v474 = vunpack.c.h.b16 %v99
    %v475 = vunpack.c.l.b16 %v100
    %v476 = vunpack.c.h.b16 %v100
    %v477 = vunpack.c.l.b16 %v101
    %v478 = vunpack.c.h.b16 %v101
    %v479 = vunpack.c.l.b16 %v102
    %v480 = vunpack.c.h.b16 %v102
    %v481 = vunpack.c.l.b16 %v103
    %v482 = vunpack.c.h.b16 %v103
    %v483 = vunpack.c.l.b16 %v104
    %v484 = vunpack.c.h.b16 %v104
    %v485 = vunpack.c.l.b16 %v105
    %v486 = vunpack.c.h.b16 %v105
    %v487 = vunpack.c.l.b16 %v106
    %v488 = vunpack.c.h.b16 %v106
    %v489 = vunpack.c.l.b16 %v107
    %v490 = vunpack.c.h.b16 %v107
    %v491 = vunpack.c.l.b16 %v108
    %v492 = vunpack.c.h.b16 %v108
    %v493 = vunpack.c.l.b16 %v109
    %v494 = vunpack.c.h.b16 %v109
    %v495 = vunpack.c.l.b16 %v110
    %v496 = vunpack.c.h.b16 %v110
    %v497 = vunpack.c.l.b16 %v111
    %v498 = vunpack.c.h.b16 %v111
    %v499 = vunpack.c.l.b16 %v112
    %v500 = vunpack.c.h.b16 %v112
    %v501 = vunpack.c.l.b16 %v113
    %v502 = vunpack.c.h.b16 %v113
    %v503 = vunpack.c.l.b16 %v114
    %v504 = vunpack.c.h.b16 %v114
    %v505 = vunpack.c.l.b16 %v115
    %v506 = vunpack.c.h.b16 %v115
    %v507 = vunpack.c.l.b16 %v116
    %v508 = vunpack.c.h.b16 %v116
    %v509 = vunpack.c.l.b16 %v117
    %v510 = vunpack.c.h.b16 %v117
    %v511 = vunpack.c.l.b16 %v118
    %v512 = vunpack.c.h.b16 %v118
    %v513 = vunpack.c.l.b16 %v119
    %v514 = vunpack.c.h.b16 %v119
    %v515 = vunpack.c.l.b16 %v120
    %v516 = vunpack.c.h.b16 %v120
    %v517 = vunpack.c.l.b16 %v121
    %v518 = vunpack.c.h.b16 %v121
    %v519 = vunpack.c.l.b16 %v122
    %v520 = vunpack.c.h.b16 %v122
    %v521 = vunpack.c.l.b16 %v123
    %v522 = vunpack.c.h.b16 %v123
    %v523 = vunpack.c.l.b16 %v124
    %v524 = vunpack.c.h.b16 %v124
    %v525 = vunpack.c.l.b16 %v125
    %v526 = vunpack.c.h.b16 %v125
    %v527 = vunpack.c.l.b16 %v126
    %v528 = vunpack.c.h.b16 %v126
    %v529 = vunpack.c.l.b16 %v127
    %v530 = vunpack.c.h.b16 %v127
    %v531 = vunpack.c.l.b16 %v128
    %v532 = vunpack.c.h.b16 %v128
    %v533 = vunpack.c.l.b16 %v129
    %v534 = vunpack.c.h.b16 %v129
    %v535 = vunpack.c.l.b16 %v130
    %v536 = vunpack.c.h.b16 %v130
    %v537 = vunpack.c.l.b16 %v131
    %v538 = vunpack.c.h.b16 %v131
    %v539 = vunpack.c.l.b16 %v132
    %v540 = vunpack.c.h.b16 %v132
    %v541 = vunpack.c.l.b16 %v133
    %v542 = vunpack.c.h.b16 %v133
    %v543 = vunpack.c.l.b16 %v134
    %v544 = vunpack.c.h.b16 %v134
    %v545 = vunpack.c.l.b16 %v135
    %v546 = vunpack.c.h.b16 %v135
    %v547 = vunpack.c.l.b16 %v136
    %v548 = vunpack.c.h.b16 %v136
    %v549 = vunpack.c.l.b16 %v137
    %v550 = vunpack.c.h.b16 %v137
    %v551 = vunpack.c.l.b16 %v138
    %v552 = vunpack.c.h.b16 %v138
    %v553 = vunpack.c.l.b16 %v139
    %v554 = vunpack.c.h.b16 %v139
    %v555 = vunpack.c.l.b16 %v140
    %v556 = vunpack.c.h.b16 %v140
    %v557 = vunpack.c.l.b16 %v141
    %v558 = vunpack.c.h.b16 %v141
    %v559 = vunpack.c.l.b16 %v142
    %v560 = vunpack.c.h.b16 %v142
    %v561 = vunpack.c.l.b16 %v143
    %v562 = vunpack.c.h.b16 %v143
    %v563 = vunpack.c.l.b16 %v144
    %v564 = vunpack.c.h.b16 %v144
    %v565 = vunpack.c.l.b16 %v145
    %v566 = vunpack.c.h.b16 %v145
    %v567 = vunpack.c.l.b16 %v146
    %v568 = vunpack.c.h.b16 %v146
    %v569 = vunpack.c.l.b16 %v147
    %v570 = vunpack.c.h.b16 %v147
    %v571 = vunpack.c.l.b16 %v148
    %v572 = vunpack.c.h.b16 %v148
    %v573 = vunpack.c.l.b16 %v149
    %v574 = vunpack.c.h.b16 %v149
    %v575 = vunpack.c.l.b16 %v150
    %v576 = vunpack.c.h.b16 %v150
    %v577 = vunpack.c.l.b16 %v151
    %v578 = vunpack.c.h.b16 %v151
    %v579 = vunpack.c.l.b16 %v152
    %v580 = vunpack.c.h.b16 %v152
    %v581 = vunpack.c.l.b16 %v153
    %v582 = vunpack.c.h.b16 %v153
    %v583 = vunpack.c.l.b16 %v154
    %v584 = vunpack.c.h.b16 %v154
    %v585 = vunpack.c.l.b16 %v155
    %v586 = vunpack.c.h.b16 %v155
    %v587 = vunpack.c.l.b16 %v156
    %v588 = vunpack.c.h.b16 %v156
    %v589 = vunpack.c.l.b16 %v157
    %v590 = vunpack.c.h.b16 %v157
    %v591 = vunpack.c.l.b16 %v158
    %v592 = vunpack.c.h.b16 %v158
    %v593 = vunpack.c.l.b16 %v159
    %v594 = vunpack.c.h.b16 %v159
    %v595 = vunpack.c.l.b16 %v160
    %v596 = vunpack.c.h.b16 %v160
    %v597 = vpack.c.b16 %v473, %v469
    %v598 = vpack.c.b16 %v474, %v470
    %v599 = vpack.c.b16 %v475, %v471
    %v600 = vpack.c.b16 %v476, %v472
    %v601 = vpack.c.b16 %v481, %v477
    %v602 = vpack.c.b16 %v482, %v478
    %v603 = vpack.c.b16 %v483, %v479
    %v604 = vpack.c.b16 %v484, %v480
    %v605 = vpack.c.b16 %v489, %v485
    %v606 = vpack.c.b16 %v490, %v486
    %v607 = vpack.c.b16 %v491, %v487
    %v608 = vpack.c.b16 %v492, %v488
    %v609 = vpack.c.b16 %v497, %v493
    %v610 = vpack.c.b16 %v498, %v494
    %v611 = vpack.c.b16 %v499, %v495
    %v612 = vpack.c.b16 %v500, %v496
    %v613 = vpack.c.b16 %v505, %v501
    %v614 = vpack.c.b16 %v506, %v502
    %v615 = vpack.c.b16 %v507, %v503
    %v616 = vpack.c.b16 %v508, %v504
    %v617 = vpack.c.b16 %v513, %v509
    %v618 = vpack.c.b16 %v514, %v510
    %v619 = vpack.c.b16 %v515, %v511
    %v620 = vpack.c.b16 %v516, %v512
    %v621 = vpack.c.b16 %v521, %v517
    %v622 = vpack.c.b16 %v522, %v518
    %v623 = vpack.c.b16 %v523, %v519
    %v624 = vpack.c.b16 %v524, %v520
    %v625 = vpack.c.b16 %v529, %v525
    %v626 = vpack.c.b16 %v530, %v526
    %v627 = vpack.c.b16 %v531, %v527
    %v628 = vpack.c.b16 %v532, %v528
    %v629 = vpack.c.b16 %v537, %v533
    %v630 = vpack.c.b16 %v538, %v534
    %v631 = vpack.c.b16 %v539, %v535
    %v632 = vpack.c.b16 %v540, %v536
    %v633 = vpack.c.b16 %v545, %v541
    %v634 = vpack.c.b16 %v546, %v542
    %v635 = vpack.c.b16 %v547, %v543
    %v636 = vpack.c.b16 %v548, %v544
    %v637 = vpack.c.b16 %v553, %v549
    %v638 = vpack.c.b16 %v554, %v550
    %v639 = vpack.c.b16 %v555, %v551
    %v640 = vpack.c.b16 %v556, %v552
    %v641 = vpack.c.b16 %v561, %v557
    %v642 = vpack.c.b16 %v562, %v558
    %v643 = vpack.c.b16 %v563, %v559
    %v644 = vpack.c.b16 %v564, %v560
    %v645 = vpack.c.b16 %v569, %v565
    %v646 = vpack.c.b16 %v570, %v566
    %v647 = vpack.c.b16 %v571, %v567
    %v648 = vpack.c.b16 %v572, %v568
    %v649 = vpack.c.b16 %v577, %v573
    %v650 = vpack.c.b16 %v578, %v574
    %v651 = vpack.c.b16 %v579, %v575
    %v652 = vpack.c.b16 %v580, %v576
    %v653 = vpack.c.b16 %v585, %v581
    %v654 = vpack.c.b16 %v586, %v582
    %v655 = vpack.c.b16 %v587, %v583
    %v656 = vpack.c.b16 %v588, %v584
    %v657 = vpack.c.b16 %v593, %v589
    %v658 = vpack.c.b16 %v594, %v590
    %v659 = vpack.c.b16 %v595, %v591
    %v660 = vpack.c.b16 %v596, %v592
    %725 = vmatpush.bf16.msra.mxu0 %v625
    %726 = vmatpush.bf16.msra.mxu0 %v621
    %727 = vmatpush.bf16.msra.mxu0 %v617
    %728 = vmatpush.bf16.msra.mxu0 %v613
    %729 = vmatpush.bf16.msra.mxu0 %v609
    %730 = vmatpush.bf16.msra.mxu0 %v605
    %731 = vmatpush.bf16.msra.mxu0 %v601
    %732 = vmatpush.bf16.msra.mxu0 %v597
    %733 = vmatmul.bf16.gmra.mxu0 %v93
    %v734 = vpop.f32.mrf.mxu0
    %v735 = vadd.f32 %v363, %v734
    %v736 = vpop.f32.mrf.mxu0
    %737 = vdwg.mxu0
    %738 = vmatpush.bf16.msra.mxu0 %v657
    %739 = vmatpush.bf16.msra.mxu0 %v653
    %740 = vmatpush.bf16.msra.mxu0 %v649
    %741 = vmatpush.bf16.msra.mxu0 %v645
    %742 = vmatpush.bf16.msra.mxu0 %v641
    %743 = vmatpush.bf16.msra.mxu0 %v637
    %744 = vmatpush.bf16.msra.mxu0 %v633
    %745 = vmatpush.bf16.msra.mxu0 %v629
    %746 = vmatmul.bf16.gmra.mxu0 %v94
    %v747 = vpop.f32.mrf.mxu0
    %v748 = vadd.f32 %v735, %v747
    %v749 = vpop.f32.mrf.mxu0
    %750 = vdwg.mxu0
    %751 = vmatpush.bf16.msra.mxu0 %v626
    %752 = vmatpush.bf16.msra.mxu0 %v622
    %753 = vmatpush.bf16.msra.mxu0 %v618
    %754 = vmatpush.bf16.msra.mxu0 %v614
    %755 = vmatpush.bf16.msra.mxu0 %v610
    %756 = vmatpush.bf16.msra.mxu0 %v606
    %757 = vmatpush.bf16.msra.mxu0 %v602
    %758 = vmatpush.bf16.msra.mxu0 %v598
    %759 = vmatmul.bf16.gmra.mxu0 %v93
    %v760 = vpop.f32.mrf.mxu0
    %v761 = vadd.f32 %v376, %v760
    %v762 = vpop.f32.mrf.mxu0
    %763 = vdwg.mxu0
    %764 = vmatpush.bf16.msra.mxu0 %v658
    %765 = vmatpush.bf16.msra.mxu0 %v654
    %766 = vmatpush.bf16.msra.mxu0 %v650
    %767 = vmatpush.bf16.msra.mxu0 %v646
    %768 = vmatpush.bf16.msra.mxu0 %v642
    %769 = vmatpush.bf16.msra.mxu0 %v638
    %770 = vmatpush.bf16.msra.mxu0 %v634
    %771 = vmatpush.bf16.msra.mxu0 %v630
    %772 = vmatmul.bf16.gmra.mxu0 %v94
    %v773 = vpop.f32.mrf.mxu0
    %v774 = vadd.f32 %v761, %v773
    %v775 = vpop.f32.mrf.mxu0
    %776 = vdwg.mxu0
    %777 = vmatpush.bf16.msra.mxu0 %v627
    %778 = vmatpush.bf16.msra.mxu0 %v623
    %779 = vmatpush.bf16.msra.mxu0 %v619
    %780 = vmatpush.bf16.msra.mxu0 %v615
    %781 = vmatpush.bf16.msra.mxu0 %v611
    %782 = vmatpush.bf16.msra.mxu0 %v607
    %783 = vmatpush.bf16.msra.mxu0 %v603
    %784 = vmatpush.bf16.msra.mxu0 %v599
    %785 = vmatmul.bf16.gmra.mxu0 %v93
    %v786 = vpop.f32.mrf.mxu0
    %v787 = vadd.f32 %v389, %v786
    %v788 = vpop.f32.mrf.mxu0
    %789 = vdwg.mxu0
    %790 = vmatpush.bf16.msra.mxu0 %v659
    %791 = vmatpush.bf16.msra.mxu0 %v655
    %792 = vmatpush.bf16.msra.mxu0 %v651
    %793 = vmatpush.bf16.msra.mxu0 %v647
    %794 = vmatpush.bf16.msra.mxu0 %v643
    %795 = vmatpush.bf16.msra.mxu0 %v639
    %796 = vmatpush.bf16.msra.mxu0 %v635
    %797 = vmatpush.bf16.msra.mxu0 %v631
    %798 = vmatmul.bf16.gmra.mxu0 %v94
    %v799 = vpop.f32.mrf.mxu0
    %v800 = vadd.f32 %v787, %v799
    %v801 = vpop.f32.mrf.mxu0
    %802 = vdwg.mxu0
    %803 = vmatpush.bf16.msra.mxu0 %v628
    %804 = vmatpush.bf16.msra.mxu0 %v624
    %805 = vmatpush.bf16.msra.mxu0 %v620
    %806 = vmatpush.bf16.msra.mxu0 %v616
    %807 = vmatpush.bf16.msra.mxu0 %v612
    %808 = vmatpush.bf16.msra.mxu0 %v608
    %809 = vmatpush.bf16.msra.mxu0 %v604
    %810 = vmatpush.bf16.msra.mxu0 %v600
    %811 = vmatmul.bf16.gmra.mxu0 %v93
    %v812 = vpop.f32.mrf.mxu0
    %v813 = vadd.f32 %v402, %v812
    %v814 = vpop.f32.mrf.mxu0
    %815 = vdwg.mxu0
    %816 = vmatpush.bf16.msra.mxu0 %v660
    %817 = vmatpush.bf16.msra.mxu0 %v656
    %818 = vmatpush.bf16.msra.mxu0 %v652
    %819 = vmatpush.bf16.msra.mxu0 %v648
    %820 = vmatpush.bf16.msra.mxu0 %v644
    %821 = vmatpush.bf16.msra.mxu0 %v640
    %822 = vmatpush.bf16.msra.mxu0 %v636
    %823 = vmatpush.bf16.msra.mxu0 %v632
    %824 = vmatmul.bf16.gmra.mxu0 %v94
    %v825 = vpop.f32.mrf.mxu0
    %v826 = vadd.f32 %v813, %v825
    %v827 = vpop.f32.mrf.mxu0
    %828 = vdwg.mxu0
    %v829 = vld [vmem:[#allocation7] sm:$0xf]
    %v831 = vperm.slane %v829, 0
    %v832 = vperm.slane %v829, 1
    %v833 = vperm.slane %v829, 2
    %v834 = vperm.slane %v829, 3
    %v839 = vadd.f32 %v748, %v831
    %v840 = vadd.f32 %v774, %v832
    %v841 = vadd.f32 %v800, %v833
    %v842 = vadd.f32 %v826, %v834
    %v843 = vmul.f32 %v839, 0.5
    %v844 = vtanh.pop %v843
    %v845 = vadd.f32 %v844, 1.0
    %v846 = vmul.f32 %v845, 0.5
    %v847 = vmul.f32 %v840, 0.5
    %v848 = vtanh.pop %v847
    %v849 = vadd.f32 %v848, 1.0
    %v850 = vmul.f32 %v849, 0.5
    %v851 = vtanh.pop %v841
    %v852 = vmul.f32 %v842, 0.5
    %v853 = vtanh.pop %v852
    %v854 = vadd.f32 %v853, 1.0
    %v855 = vmul.f32 %v854, 0.5
    %v856 = vld [vmem:[%s10] sm:$0x3]
    %v857 = vmul.f32 %v850, %v856
    %v858 = vmul.f32 %v846, %v851
    %v859 = vadd.f32 %v857, %v858
    %v860 = vtanh.pop %v859
    %v861 = vmul.f32 %v855, %v860
    %862 = vst [vmem:[%s10] sm:$0x3] %v859
    %863 = vst [vmem:[%s9] sm:$0x3] %v861
    %v864 = vld [vmem:[%s6] sm:$0x1]
    %v866 = vperm.slane %v864, 0
    %v868 = vmul.f32 %v861, %v866
    %vm869 = vcmask 1041408
    %v870 = vsel %vm869, %v868, 0.0
    %871 = vadd.xlane.f32.xlu0 %v870
    %v872 = vpop.xlane.xlu0 %871
    %s873 = sld [smem:[#allocation2]]
    %v874 = vstv %s873
    %v875 = vadd.f32 %v872, %v874
    %vm876 = vcmask 1024
    %877 = vst.msk [vmem:[%s8] sm:$0x3] %vm876, %v875
    // Predicated region
    $region50: #{tpu_custom_call.1} parent=1 // pred_check
      _
    $region51: #{tpu_custom_call.1} parent=1 // pred_check_branch
      %879 = sbr.rel (0) target = $region53
    $region52: #{tpu_custom_call.1} parent=1 // pred_region
      _
    $region53: #{tpu_custom_call.1} parent=1 // pred_fallthru
      _
    // Predicated region
    $region54: #{tpu_custom_call.1} parent=1 // pred_check
      _
    $region55: #{tpu_custom_call.1} parent=1 // pred_check_branch
      %881 = sbr.rel (0) target = $region57
    $region56: #{tpu_custom_call.1} parent=1 // pred_region
      _
    $region57: #{tpu_custom_call.1} parent=1 // pred_fallthru
      _
    // Predicated region
    $region58: #{tpu_custom_call.1} parent=1 // pred_check
      _
    $region59: #{tpu_custom_call.1} parent=1 // pred_check_branch
      %883 = sbr.rel (0) target = $region61
    $region60: #{tpu_custom_call.1} parent=1 // pred_region
      _
    $region61: #{tpu_custom_call.1} parent=1 // pred_fallthru
      _
    // Predicated region
    $region62: #{tpu_custom_call.1} parent=1 // pred_check
      _
    $region63: #{tpu_custom_call.1} parent=1 // pred_check_branch
      %885 = sbr.rel (0) target = $region65
    $region64: #{tpu_custom_call.1} parent=1 // pred_region
      _
    $region65: #{tpu_custom_call.1} parent=1 // pred_fallthru
      _
    // Predicated region
    $region66: #{tpu_custom_call.1} parent=1 // pred_check
      _
    $region67: #{tpu_custom_call.1} parent=1 // pred_check_branch
      %887 = sbr.rel (0) target = $region69
    $region68: #{tpu_custom_call.1} parent=1 // pred_region
      _
    $region69: #{tpu_custom_call.1} parent=1 // pred_fallthru
      _
    // Predicated region
    $region70: #{tpu_custom_call.1} parent=1 // pred_check
      _
    $region71: #{tpu_custom_call.1} parent=1 // pred_check_branch
      %889 = sbr.rel (0) target = $region73
    $region72: #{tpu_custom_call.1} parent=1 // pred_region
      _
    $region73: #{tpu_custom_call.1} parent=1 // pred_fallthru
      _
    %890 = vsyncpa [#allocation4], 1
    %891 = vsyncpa [#allocation6], 1

</llo_original>
